<compile_context>
chip_gen: v7x
topology: tpu7x:2x2x1
jax: 0.10.0
libtpu: 0.0.40
codegen_flags: <defaults>
</compile_context>

<pallas_src>
import jax
import jax.numpy as jnp
from jax.experimental import pallas as pl
from jax.experimental.pallas import tpu as pltpu


# ---- configuration ----------------------------------------------------------
_LANE = 128                                   # vreg lane width
_WIDTH_CANDIDATES = (4096, 2048, 1024, 512, 256, 128)
_MIN_SPLIT_BYTES = 1 * 1024 * 1024            # split single-tile arrays >= 1 MiB


def _sublane_multiple(dtype):
    """Sublane packing granularity: 8 for 4-byte, 16 for 2-byte, 32 for 1-byte."""
    itemsize = jnp.dtype(dtype).itemsize
    return max(8, 32 // max(itemsize, 1))


def _tpu_budgets():
    """Per-generation (tile_bytes_cap, vmem_limit_bytes)."""
    try:
        vmem = int(pltpu.get_tpu_info().vmem_capacity_bytes)
    except Exception:
        # Unknown chip / interpret mode: conservative budget valid everywhere.
        return 8 * 1024 * 1024, 48 * 1024 * 1024
    if vmem <= 64 * 1024 * 1024:
        # v7x: 64 MiB VMEM per TensorCore -> 10 MiB tiles, 4x double-buffered.
        return 10 * 1024 * 1024, 48 * 1024 * 1024
    # v5e / v6e: 128 MiB physical VMEM -> 12 MiB tiles, 64 MiB scoped limit.
    return 12 * 1024 * 1024, 64 * 1024 * 1024


def _round_up(x, m):
    return ((x + m - 1) // m) * m


# ---- kernels ----------------------------------------------------------------
def _copy_kernel(x_ref, o_ref):
    # Pure block copy: HBM bandwidth is the only gate.
    o_ref[...] = x_ref[...]


def _pallas_copy_2d(x2d, row_tile, vmem_limit):
    """Tiled lane-dense copy of a (rows, width) array; last block may be clipped."""
    rows, width = x2d.shape
    grid = (pl.cdiv(rows, row_tile),)
    itemsize = jnp.dtype(x2d.dtype).itemsize
    tile_bytes = row_tile * width * itemsize

    in_spec = pl.BlockSpec((row_tile, width), lambda i: (i, 0))
    # Deeper input buffering only when the grid is long and VMEM has headroom
    # (3 in + 2 out buffers must fit under the scoped limit).
    if grid[0] >= 8 and 5 * tile_bytes + (2 << 20) <= vmem_limit:
        try:
            in_spec = pl.BlockSpec((row_tile, width), lambda i: (i, 0),
                                   pipeline_mode=pl.Buffered(3))
        except Exception:
            in_spec = pl.BlockSpec((row_tile, width), lambda i: (i, 0))

    return pl.pallas_call(
        _copy_kernel,
        out_shape=jax.ShapeDtypeStruct((rows, width), x2d.dtype),
        grid=grid,
        in_specs=[in_spec],
        out_specs=pl.BlockSpec((row_tile, width), lambda i: (i, 0)),
        compiler_params=pltpu.CompilerParams(
            dimension_semantics=("parallel",),   # lets v7x shard over both TCs
            vmem_limit_bytes=vmem_limit,
        ),
    )(x2d)


def _pallas_copy_1d(flat, chunk, vmem_limit):
    """Chunked 1-D copy; chunk is a multiple of 128, last block clipped."""
    total = flat.shape[0]
    grid = (pl.cdiv(total, chunk),)
    return pl.pallas_call(
        _copy_kernel,
        out_shape=jax.ShapeDtypeStruct((total,), flat.dtype),
        grid=grid,
        in_specs=[pl.BlockSpec((chunk,), lambda i: (i,))],
        out_specs=pl.BlockSpec((chunk,), lambda i: (i,)),
        compiler_params=pltpu.CompilerParams(
            dimension_semantics=("parallel",),
            vmem_limit_bytes=vmem_limit,
        ),
    )(flat)


# ---- copy-path planning ------------------------------------------------------
def _copy_aligned(flat, tile_cap, vmem_limit):
    """Lane-dense tiled copy; requires flat.size % 128 == 0."""
    total = flat.size
    dtype = flat.dtype
    itemsize = jnp.dtype(dtype).itemsize
    sub = _sublane_multiple(dtype)

    # Widest lane-dense width dividing the element count (128 always qualifies).
    width = next(w for w in _WIDTH_CANDIDATES if total % w == 0)
    rows = total // width
    x2d = jnp.reshape(flat, (rows, width))

    if rows <= sub:
        # Tiny: one full-extent block (block shape equals the array shape).
        return jnp.reshape(_pallas_copy_2d(x2d, rows, vmem_limit), (-1,))

    cap_rows = max(sub, (tile_cap // (width * itemsize)) // sub * sub)
    row_tile = min(cap_rows, (rows // sub) * sub)   # multiple of sub, <= rows

    # Guarantee >= 2 grid steps for mid-size arrays so both v7x TCs drive HBM.
    if row_tile >= rows and total * itemsize >= _MIN_SPLIT_BYTES and rows >= 2 * sub:
        row_tile = _round_up(-(-rows // 2), sub)

    return jnp.reshape(_pallas_copy_2d(x2d, row_tile, vmem_limit), (-1,))


def _copy_ragged(flat, tile_cap, vmem_limit):
    """Copy for element counts not divisible by 128 (no padding materialized)."""
    total = flat.size
    dtype = flat.dtype
    itemsize = jnp.dtype(dtype).itemsize
    sub = _sublane_multiple(dtype)

    if total < _LANE:
        # Sub-vreg array: single full-extent (1, total) block.
        out2d = _pallas_copy_2d(jnp.reshape(flat, (1, total)), 1, vmem_limit)
        return jnp.reshape(out2d, (-1,))

    # Chunked 1-D copy: chunk is a multiple of 128 and <= total, so the grid has
    # >= 2 steps and the final partial block is clipped in-kernel (2N bytes total).
    lane_block = sub * _LANE
    cap_elems = max(_LANE, (tile_cap // itemsize) // lane_block * lane_block)
    chunk = max(_LANE, min(cap_elems, (total // _LANE) * _LANE))
    return _pallas_copy_1d(flat, chunk, vmem_limit)


# ---- aten.view semantics -----------------------------------------------------
def _resolve_shape(total, target_shape):
    """Resolve an aten.view target shape (supports a single -1 wildcard)."""
    shape = [int(d) for d in target_shape]
    if shape.count(-1) > 1:
        raise ValueError("view: at most one -1 dimension is allowed")
    if -1 in shape:
        known = 1
        for d in shape:
            if d != -1:
                known *= d
        if known == 0 or total % known != 0:
            raise ValueError(
                f"view: cannot infer -1 in {tuple(target_shape)} from {total} elements")
        shape[shape.index(-1)] = total // known
    prod = 1
    for d in shape:
        prod *= d
    if prod != total:
        raise ValueError(
            f"view: shape {tuple(shape)} does not match {total} input elements")
    return tuple(shape)


def aten_view(x, target_shape, *, materialize=False):
    """Semantics of torch.ops.aten.view.default(x, target_shape) (contiguous input).

    Default path is metadata-only (zero HBM traffic), matching torch semantics.
    `materialize=True` forces a fresh buffer via the lane-dense Pallas copy.
    """
    total = x.size
    out_shape = _resolve_shape(total, target_shape)

    if not materialize or total == 0:
        return jnp.reshape(x, out_shape)

    tile_cap, vmem_limit = _tpu_budgets()
    flat = jnp.reshape(x, (-1,))          # metadata-only row-major flatten
    if total % _LANE == 0:
        out_flat = _copy_aligned(flat, tile_cap, vmem_limit)
    else:
        out_flat = _copy_ragged(flat, tile_cap, vmem_limit)
    return jnp.reshape(out_flat, out_shape)


if __name__ == "__main__":
    key = jax.random.PRNGKey(0)

    # swin_v2_t-style view: (B, H, W, C) -> (B, H*W, C), small shapes.
    B, H, W, C = 2, 8, 8, 32
    x = jax.random.normal(key, (B, H, W, C), dtype=jnp.float32)
    target = (B, H * W, C)
    ref = jnp.reshape(x, target)

    # 1) Default zero-copy path (metadata-only, as the perf review recommends).
    out_meta = jax.block_until_ready(aten_view(x, target))
    assert out_meta.shape == target and out_meta.dtype == x.dtype
    assert bool(jnp.all(out_meta == ref))

    # 2) Wildcard (-1) dimension.
    out_wild = jax.block_until_ready(aten_view(x, (B, -1, C)))
    assert out_wild.shape == target
    assert bool(jnp.all(out_wild == ref))

    # 3) Materialized Pallas copy, tiny aligned case (single full-extent block).
    out_mat = jax.block_until_ready(aten_view(x, target, materialize=True))
    assert bool(jnp.all(out_mat == ref))

    # 3b) Same shape in bf16 (different sublane packing).
    xb = x.astype(jnp.bfloat16)
    out_b = jax.block_until_ready(aten_view(xb, target, materialize=True))
    assert out_b.dtype == jnp.bfloat16
    assert bool(jnp.all(out_b == jnp.reshape(xb, target)))

    # 4) Mid-size aligned case (8 MiB f32): forced >= 2 grid steps (v7x dual-TC).
    x2 = jax.random.normal(jax.random.PRNGKey(0), (4, 64, 64, 128), dtype=jnp.float32)
    tgt2 = (4, 64 * 64, 128)
    out2 = jax.block_until_ready(aten_view(x2, tgt2, materialize=True))
    assert bool(jnp.all(out2 == jnp.reshape(x2, tgt2)))

    # 5) Aligned case whose row count is not a tile multiple: clipped last block.
    x5 = jax.random.normal(jax.random.PRNGKey(0), (20, 4096), dtype=jnp.float32)
    out5 = jax.block_until_ready(aten_view(x5, (-1,), materialize=True))
    assert bool(jnp.all(out5 == jnp.reshape(x5, (-1,))))

    # 6) Ragged sizes: sub-128 full-extent block, and chunked 1-D clipped copy.
    x3 = jax.random.normal(jax.random.PRNGKey(0), (3, 5, 3), dtype=jnp.float32)   # 45 elems
    out3 = jax.block_until_ready(aten_view(x3, (45,), materialize=True))
    assert bool(jnp.all(out3 == jnp.reshape(x3, (45,))))

    x4 = jax.random.normal(jax.random.PRNGKey(0), (1000,), dtype=jnp.float32)     # 1000 % 128 != 0
    out4 = jax.block_until_ready(aten_view(x4, (8, 125), materialize=True))
    assert bool(jnp.all(out4 == jnp.reshape(x4, (8, 125))))

    print("KERNEL_OK")
</pallas_src>

<mosaic_0001>
module attributes {stable_mosaic.version = 11 : i64} {
  func.func @_copy_kernel(%arg0: i32, %arg1: memref<1x4096xf32, #tpu.memory_space<vmem>>, %arg2: memref<1x4096xf32, #tpu.memory_space<vmem>>) attributes {dimension_semantics = [#tpu.dimension_semantics<parallel>], iteration_bounds = array<i64: 1>, scalar_prefetch = 0 : i64, scratch_operands = 0 : i64, tpu.core_type = #tpu.core_type<tc>, window_params = [{transform_indices = @transform_0, window_bounds = array<i64: 1, 4096>}, {transform_indices = @transform_1, window_bounds = array<i64: 1, 4096>}]} {
    %c0 = arith.constant 0 : index
    %c0_0 = arith.constant 0 : index
    %0 = vector.load %arg1[%c0, %c0_0] : memref<1x4096xf32, #tpu.memory_space<vmem>>, vector<1x4096xf32>
    %c0_1 = arith.constant 0 : index
    %c0_2 = arith.constant 0 : index
    %1 = vector.load %arg2[%c0_1, %c0_2] : memref<1x4096xf32, #tpu.memory_space<vmem>>, vector<1x4096xf32>
    tpu.vector_store %arg2[%c0_1, %c0_2], %0 {strides = array<i32>} : memref<1x4096xf32, #tpu.memory_space<vmem>>, vector<1x4096xf32>,
    return
  }
  func.func @transform_0(%arg0: i32) -> (i32, i32) {
    %c0_i32 = arith.constant 0 : i32
    %c0_i32_0 = arith.constant 0 : i32
    return %arg0, %c0_i32 : i32, i32
  }
  func.func @transform_1(%arg0: i32) -> (i32, i32) {
    %c0_i32 = arith.constant 0 : i32
    %c0_i32_0 = arith.constant 0 : i32
    return %arg0, %c0_i32 : i32, i32
  }
}

</mosaic_0001>

<llo_original>
// kernel: tpu_custom_call.1
$region0: #{tpu_custom_call.1}
  #allocation0 [shape = 'u32[]', space=smem, size = 0x4, offset = 0x4, fixed_abs, tag = 'smem constant byte address 0x4 - core index']
  #allocation1 [shape = 'u32[144,128]{1,0:T(1,128)}', space=vmem, size = 0x12000, scoped, tag = 'internal scratch']
  %s0 = inlined_call_operand.hbm [shape: f32[1,4096], index: 0, kind: input, shape index: {}]
  %s1 = inlined_call_operand.hbm [shape: f32[1,4096], index: 1, kind: output, shape index: {}]
  %s2 = sld [smem:[#allocation0]]
  $region18: #{tpu_custom_call.1} parent=0
    _
  %s4 = ssub.s32 1, %s2
  %s5 = scalar_select 0, %s4, %s2
  $region1: #{tpu_custom_call.1} parent=0
    #allocation2 [shape = 'u8[16384]{0}', space=vmem, size = 0x4000, scoped, tag = 'input window, operand 0, single buffered']
    #allocation3 [shape = 's32[1]{0}', space=sflag, size = 0x4, scoped, tag = 'scoped memory for tpu_custom_call.1']
    #allocation4 [shape = 's32[1]{0}', space=sflag, size = 0x4, scoped, tag = 'scoped memory for tpu_custom_call.1']
    #allocation5 [shape = 'u8[16384]{0}', space=vmem, size = 0x4000, scoped, tag = 'output window, operand 0, single buffered']
    %6 = vsyncpa [#allocation3], 0
    %7 = vsyncpa [#allocation4], 0
    // Predicated region
    $region2: #{tpu_custom_call.1} parent=1 // pred_check
      _
    $region3: #{tpu_custom_call.1} parent=1 // pred_check_branch
      %9 = sbr.rel (0) target = $region5
    $region4: #{tpu_custom_call.1} parent=1 // pred_region
      %s11 = ssub.s32 512, 512
      %12 = vsyncadd [#allocation3], %s11
      %s14 = sshll.u32 [#allocation2], 4
      %s15 = int_to_ptr.vmem [resolvable:$true] %s14
      %17 = dma.hbm_to_vmem [thread:$0]  %s0, 512, %s15, [#allocation3]
    $region5: #{tpu_custom_call.1} parent=1 // pred_fallthru
      _
    // Predicated region
    $region6: #{tpu_custom_call.1} parent=1 // pred_check
      _
    $region7: #{tpu_custom_call.1} parent=1 // pred_check_branch
      %19 = sbr.rel (0) target = $region9
    $region8: #{tpu_custom_call.1} parent=1 // pred_region
      %20 = dma.done [#allocation3], 512
    $region9: #{tpu_custom_call.1} parent=1 // pred_fallthru
      _
    %v21 = vld [vmem:[#allocation2] sm:$0xff]
    %v22 = vld [vmem:[#allocation2 + $0x8] sm:$0xff]
    %v23 = vld [vmem:[#allocation2 + $0x10] sm:$0xff]
    %v24 = vld [vmem:[#allocation2 + $0x18] sm:$0xff]
    %25 = vst [vmem:[#allocation5] sm:$0xff] %v21
    %26 = vst [vmem:[#allocation5 + $0x8] sm:$0xff] %v22
    %27 = vst [vmem:[#allocation5 + $0x10] sm:$0xff] %v23
    %28 = vst [vmem:[#allocation5 + $0x18] sm:$0xff] %v24
    // Predicated region
    $region10: #{tpu_custom_call.1} parent=1 // pred_check
      _
    $region11: #{tpu_custom_call.1} parent=1 // pred_check_branch
      %30 = sbr.rel (0) target = $region13
    $region12: #{tpu_custom_call.1} parent=1 // pred_region
      %s32 = ssub.s32 512, 512
      %33 = vsyncadd [#allocation4], %s32
      %s35 = sshll.u32 [#allocation5], 4
      %s36 = int_to_ptr.vmem [resolvable:$true] %s35
      %38 = dma.vmem_to_hbm [thread:$0]  %s36, 512, %s1, [#allocation4]
    $region13: #{tpu_custom_call.1} parent=1 // pred_fallthru
      _
    // Predicated region
    $region14: #{tpu_custom_call.1} parent=1 // pred_check
      _
    $region15: #{tpu_custom_call.1} parent=1 // pred_check_branch
      %40 = sbr.rel (0) target = $region17
    $region16: #{tpu_custom_call.1} parent=1 // pred_region
      %41 = dma.done [#allocation4], 512
    $region17: #{tpu_custom_call.1} parent=1 // pred_fallthru
      _
    %42 = vsyncpa [#allocation3], 1
    %43 = vsyncpa [#allocation4], 1

</llo_original>
